<compile_context>
chip_gen: v7x
topology: tpu7x:2x2x1
jax: 0.10.0
libtpu: 0.0.40
codegen_flags: <defaults>
</compile_context>

<pallas_src>
import functools

import jax
import jax.numpy as jnp
from jax.experimental import pallas as pl
from jax.experimental.pallas import tpu as pltpu


def _round_up(x: int, m: int) -> int:
    return ((x + m - 1) // m) * m


def residual_block_kernel(x_ref, wt_ref, b_ref, o_ref):
    x = x_ref[...]                                   # (tm, Hp), input dtype
    # Linear: x @ W^T (W^T pre-transposed in the wrapper) -> f32 accumulation
    # on the MXU.  No in-kernel transpose / relayout.
    fx = jnp.dot(x, wt_ref[...], preferred_element_type=jnp.float32)
    # Elementwise tail kept in f32 (bias add, ReLU, residual add) — cheap on
    # the VPU and avoids bf16 pack/unpack work on v5e.
    fx = fx + b_ref[...].astype(jnp.float32)         # (1, Hp) broadcast
    fx = jnp.maximum(fx, 0.0)
    # ResidualBlock.forward: fx + inputs (shapes match by construction).
    o_ref[...] = (fx + x.astype(jnp.float32)).astype(o_ref.dtype)


@functools.partial(jax.jit, static_argnames=("tm", "compute_dtype"))
def residual_block(x, w, b, *, tm=512, compute_dtype=None):
    """out = relu(x @ w.T + b) + x, fused in a single Pallas kernel.

    x: (N, H)   w: (H, H) PyTorch (out_features, in_features)   b: (H,)
    tm: batch tile (rows per grid step).
    compute_dtype: optionally cast matmul operands (e.g. jnp.bfloat16);
                   accumulation and the elementwise tail stay in f32.
    """
    n, h = x.shape
    assert w.shape == (h, h), "inner module output size must match input size"
    out_dtype = x.dtype

    # Lane-dense feature dim (multiple of 128) and sublane-aligned batch tile.
    hp = _round_up(max(h, 128), 128)
    tm = min(tm, _round_up(n, 8))
    np_ = _round_up(n, tm)

    # Hoist the weight transpose out of the kernel (one-time, static weights):
    # PyTorch (out, in) -> (in, out) so the kernel does a plain x @ W^T.
    w_t = w.T

    # Zero-pad to the lane/sublane-aligned shapes.  Padded W/b entries are
    # zero, so padded feature columns produce relu(0)=0 + 0 and padded rows
    # are sliced off below — semantics are unchanged.
    x_p = jnp.pad(x, ((0, np_ - n), (0, hp - h)))
    wt_p = jnp.pad(w_t, ((0, hp - h), (0, hp - h)))
    b_p = jnp.pad(b.reshape(1, h), ((0, 0), (0, hp - h)))

    if compute_dtype is not None:
        x_p = x_p.astype(compute_dtype)
        wt_p = wt_p.astype(compute_dtype)

    op_bytes = jnp.dtype(x_p.dtype).itemsize
    out_bytes = jnp.dtype(out_dtype).itemsize
    grid = (np_ // tm,)

    # NOTE: for very large H (f32 W >= ~16 MiB) raise vmem_limit_bytes via
    # pltpu.CompilerParams and/or use compute_dtype=jnp.bfloat16 so the
    # resident W^T fits v7x's 64 MiB VMEM.
    out = pl.pallas_call(
        residual_block_kernel,
        out_shape=jax.ShapeDtypeStruct((np_, hp), out_dtype),
        grid=grid,
        in_specs=[
            pl.BlockSpec((tm, hp), lambda i: (i, 0)),   # x: tiled over batch
            pl.BlockSpec((hp, hp), lambda i: (0, 0)),   # W^T: resident in VMEM
            pl.BlockSpec((1, hp), lambda i: (0, 0)),    # b:   resident in VMEM
        ],
        out_specs=pl.BlockSpec((tm, hp), lambda i: (i, 0)),
        compiler_params=pltpu.CompilerParams(
            dimension_semantics=("parallel",),          # 2 TCs on v7x
        ),
        cost_estimate=pl.CostEstimate(
            flops=2 * np_ * hp * hp,
            transcendentals=0,
            bytes_accessed=(np_ * hp * op_bytes            # x in
                            + hp * hp * op_bytes           # W^T in
                            + hp * op_bytes                # b in
                            + np_ * hp * out_bytes),       # out
        ),
    )(x_p, wt_p, b_p)

    return out[:n, :h]


if __name__ == "__main__":
    key = jax.random.PRNGKey(0)
    k_x, k_w, k_b = jax.random.split(key, 3)

    N, H = 8, 32  # small shapes: batch=8, hidden=32
    x = jax.random.normal(k_x, (N, H), dtype=jnp.float32)
    # Deterministic synthetic parameters (PyTorch Linear-style shapes).
    w = jax.random.normal(k_w, (H, H), dtype=jnp.float32) * 0.1
    b = jax.random.normal(k_b, (H,), dtype=jnp.float32) * 0.1

    out = residual_block(x, w, b)
    jax.block_until_ready(out)

    # Reference check in plain JAX (same semantics as the PyTorch forward).
    ref = jnp.maximum(x @ w.T + b[None, :], 0.0) + x
    assert out.shape == x.shape
    assert jnp.allclose(out, ref, atol=1e-5, rtol=1e-5)

    # Optional bf16-operand path (f32 accumulate) — looser tolerance.
    out_bf16 = residual_block(x, w, b, compute_dtype=jnp.bfloat16)
    jax.block_until_ready(out_bf16)
    assert jnp.allclose(out_bf16, ref, atol=3e-2, rtol=3e-2)

    print("KERNEL_OK")
</pallas_src>

<mosaic_0001>
module attributes {stable_mosaic.version = 11 : i64} {
  func.func @residual_block_kernel(%arg0: i32, %arg1: memref<8x128xf32, #tpu.memory_space<vmem>>, %arg2: memref<128x128xf32, #tpu.memory_space<vmem>>, %arg3: memref<1x128xf32, #tpu.memory_space<vmem>>, %arg4: memref<8x128xf32, #tpu.memory_space<vmem>>) attributes {dimension_semantics = [#tpu.dimension_semantics<parallel>], iteration_bounds = array<i64: 1>, scalar_prefetch = 0 : i64, scratch_operands = 0 : i64, tpu.core_type = #tpu.core_type<tc>, window_params = [{transform_indices = @transform_0, window_bounds = array<i64: 8, 128>}, {pipeline_mode = #tpu.pipeline_mode<synchronous>, transform_indices = @transform_1, window_bounds = array<i64: 128, 128>}, {pipeline_mode = #tpu.pipeline_mode<synchronous>, transform_indices = @transform_2, window_bounds = array<i64: 1, 128>}, {transform_indices = @transform_3, window_bounds = array<i64: 8, 128>}]} {
    %c0 = arith.constant 0 : index
    %c0_0 = arith.constant 0 : index
    %0 = vector.load %arg1[%c0, %c0_0] : memref<8x128xf32, #tpu.memory_space<vmem>>, vector<8x128xf32>
    %c0_1 = arith.constant 0 : index
    %c0_2 = arith.constant 0 : index
    %1 = vector.load %arg2[%c0_1, %c0_2] : memref<128x128xf32, #tpu.memory_space<vmem>>, vector<128x128xf32>
    %cst = arith.constant dense<0.000000e+00> : vector<8x128xf32>
    %2 = tpu.matmul %0, %1, %cst {dimension_numbers = #tpu.dot_dimension_numbers<[1], [0], [0], [1], [0, 0, 1, 1], [], []>} : vector<8x128xf32>, vector<128x128xf32>, vector<8x128xf32> -> vector<8x128xf32>
    %c0_3 = arith.constant 0 : index
    %c0_4 = arith.constant 0 : index
    %3 = vector.load %arg3[%c0_3, %c0_4] : memref<1x128xf32, #tpu.memory_space<vmem>>, vector<1x128xf32>
    %4 = vector.broadcast %3 : vector<1x128xf32> to vector<8x128xf32>
    %5 = arith.addf %2, %4 : vector<8x128xf32>
    %cst_5 = arith.constant 0.000000e+00 : f32
    %6 = vector.broadcast %cst_5 : f32 to vector<8x128xf32>
    %7 = arith.maximumf %5, %6 : vector<8x128xf32>
    %8 = arith.addf %7, %0 : vector<8x128xf32>
    %c0_6 = arith.constant 0 : index
    %c0_7 = arith.constant 0 : index
    %9 = vector.load %arg4[%c0_6, %c0_7] : memref<8x128xf32, #tpu.memory_space<vmem>>, vector<8x128xf32>
    tpu.vector_store %arg4[%c0_6, %c0_7], %8 {strides = array<i32>} : memref<8x128xf32, #tpu.memory_space<vmem>>, vector<8x128xf32>,
    return
  }
  func.func @transform_0(%arg0: i32) -> (i32, i32) {
    %c0_i32 = arith.constant 0 : i32
    %c0_i32_0 = arith.constant 0 : i32
    return %arg0, %c0_i32 : i32, i32
  }
  func.func @transform_1(%arg0: i32) -> (i32, i32) {
    %c0_i32 = arith.constant 0 : i32
    %c0_i32_0 = arith.constant 0 : i32
    %c0_i32_1 = arith.constant 0 : i32
    return %c0_i32, %c0_i32_0 : i32, i32
  }
  func.func @transform_2(%arg0: i32) -> (i32, i32) {
    %c0_i32 = arith.constant 0 : i32
    %c0_i32_0 = arith.constant 0 : i32
    %c0_i32_1 = arith.constant 0 : i32
    return %c0_i32, %c0_i32_0 : i32, i32
  }
  func.func @transform_3(%arg0: i32) -> (i32, i32) {
    %c0_i32 = arith.constant 0 : i32
    %c0_i32_0 = arith.constant 0 : i32
    return %arg0, %c0_i32 : i32, i32
  }
}

</mosaic_0001>

<llo_original>
// kernel: residual_block.1
$region0: #{residual_block.1}
  #allocation0 [shape = 'u32[]', space=smem, size = 0x4, offset = 0x4, fixed_abs, tag = 'smem constant byte address 0x4 - core index']
  #allocation1 [shape = 'u32[144,128]{1,0:T(1,128)}', space=vmem, size = 0x12000, scoped, tag = 'internal scratch']
  %s0 = inlined_call_operand.vmem [shape: f32[8,128], index: 0, kind: input, shape index: {}]
  %s1 = inlined_call_operand.vmem [shape: f32[128,128], index: 1, kind: input, shape index: {}]
  %s2 = inlined_call_operand.vmem [shape: f32[1,128], index: 2, kind: input, shape index: {}]
  %s3 = inlined_call_operand.hbm [shape: f32[8,128], index: 3, kind: output, shape index: {}]
  %s4 = sld [smem:[#allocation0]]
  $region22: #{residual_block.1} parent=0
    _
  %s6 = ssub.s32 1, %s4
  %s7 = scalar_select 0, %s6, %s4
  $region1: #{residual_block.1} parent=0
    #allocation2 [shape = 'u8[4096]{0}', space=vmem, size = 0x1000, scoped, tag = 'output window, operand 0, single buffered']
    #allocation3 [shape = 's32[1]{0}', space=sflag, size = 0x4, scoped, tag = 'scoped memory for residual_block.1']
    %8 = vsyncpa [#allocation3], 0
    // Predicated region
    $region2: #{residual_block.1} parent=1 // pred_check
      _
    $region3: #{residual_block.1} parent=1 // pred_check_branch
      %10 = sbr.rel (0) target = $region5
    $region4: #{residual_block.1} parent=1 // pred_region
      _
    $region5: #{residual_block.1} parent=1 // pred_fallthru
      _
    // Predicated region
    $region6: #{residual_block.1} parent=1 // pred_check
      _
    $region7: #{residual_block.1} parent=1 // pred_check_branch
      %12 = sbr.rel (0) target = $region9
    $region8: #{residual_block.1} parent=1 // pred_region
      _
    $region9: #{residual_block.1} parent=1 // pred_fallthru
      _
    // Predicated region
    $region10: #{residual_block.1} parent=1 // pred_check
      _
    $region11: #{residual_block.1} parent=1 // pred_check_branch
      %14 = sbr.rel (0) target = $region13
    $region12: #{residual_block.1} parent=1 // pred_region
      _
    $region13: #{residual_block.1} parent=1 // pred_fallthru
      _
    %v15 = vld [vmem:[%s0] sm:$0xff]
    %v16 = vld [vmem:[%s1] sm:$0xff]
    %v17 = vld [vmem:[%s1 + $0x8] sm:$0xff]
    %v18 = vld [vmem:[%s1 + $0x10] sm:$0xff]
    %v19 = vld [vmem:[%s1 + $0x18] sm:$0xff]
    %v20 = vld [vmem:[%s1 + $0x20] sm:$0xff]
    %v21 = vld [vmem:[%s1 + $0x28] sm:$0xff]
    %v22 = vld [vmem:[%s1 + $0x30] sm:$0xff]
    %v23 = vld [vmem:[%s1 + $0x38] sm:$0xff]
    %v24 = vld [vmem:[%s1 + $0x40] sm:$0xff]
    %v25 = vld [vmem:[%s1 + $0x48] sm:$0xff]
    %v26 = vld [vmem:[%s1 + $0x50] sm:$0xff]
    %v27 = vld [vmem:[%s1 + $0x58] sm:$0xff]
    %v28 = vld [vmem:[%s1 + $0x60] sm:$0xff]
    %v29 = vld [vmem:[%s1 + $0x68] sm:$0xff]
    %v30 = vld [vmem:[%s1 + $0x70] sm:$0xff]
    %v31 = vld [vmem:[%s1 + $0x78] sm:$0xff]
    %v32 = vld [vmem:[%s2] sm:$0x1]
    %v34 = vlaneseq
    %v35 = vshrl.u32 %v34, 7
    %v36 = vsub.s32 0, %v35
    %v37 = vrot.slane %v32, %v36
    %39 = vmatprep.subr.mxu0 0.0
    %40 = vmatpush1.msra.mxu0 %v16
    %41 = vmatprep.subr.mxu0 0.0
    %42 = vmatpush1.msra.mxu0 %v17
    %43 = vmatprep.subr.mxu0 0.0
    %44 = vmatpush1.msra.mxu0 %v18
    %45 = vmatprep.subr.mxu0 0.0
    %46 = vmatpush1.msra.mxu0 %v19
    %47 = vmatprep.subr.mxu0 0.0
    %48 = vmatpush1.msra.mxu0 %v20
    %49 = vmatprep.subr.mxu0 0.0
    %50 = vmatpush1.msra.mxu0 %v21
    %51 = vmatprep.subr.mxu0 0.0
    %52 = vmatpush1.msra.mxu0 %v22
    %53 = vmatprep.subr.mxu0 0.0
    %54 = vmatpush1.msra.mxu0 %v23
    %55 = vmatprep.subr.mxu0 0.0
    %56 = vmatpush1.msra.mxu0 %v24
    %57 = vmatprep.subr.mxu0 0.0
    %58 = vmatpush1.msra.mxu0 %v25
    %59 = vmatprep.subr.mxu0 0.0
    %60 = vmatpush1.msra.mxu0 %v26
    %61 = vmatprep.subr.mxu0 0.0
    %62 = vmatpush1.msra.mxu0 %v27
    %63 = vmatprep.subr.mxu0 0.0
    %64 = vmatpush1.msra.mxu0 %v28
    %65 = vmatprep.subr.mxu0 0.0
    %66 = vmatpush1.msra.mxu0 %v29
    %67 = vmatprep.subr.mxu0 0.0
    %68 = vmatpush1.msra.mxu0 %v30
    %69 = vmatprep.subr.mxu0 0.0
    %70 = vmatpush1.msra.mxu0 %v31
    %71 = vmatprep.subr.mxu0 0.0
    %72 = vmatpush1.msra.mxu0 0.0
    %73 = vmatprep.subr.mxu0 0.0
    %74 = vmatpush1.msra.mxu0 0.0
    %75 = vmatprep.subr.mxu0 0.0
    %76 = vmatpush1.msra.mxu0 0.0
    %77 = vmatprep.subr.mxu0 0.0
    %78 = vmatpush1.msra.mxu0 0.0
    %79 = vmatprep.subr.mxu0 0.0
    %80 = vmatpush1.msra.mxu0 0.0
    %81 = vmatprep.subr.mxu0 0.0
    %82 = vmatpush1.msra.mxu0 0.0
    %83 = vmatprep.subr.mxu0 0.0
    %84 = vmatpush1.msra.mxu0 0.0
    %85 = vmatprep.subr.mxu0 0.0
    %86 = vmatpush1.msra.mxu0 0.0
    %87 = vmatprep.subr.mxu0 0.0
    %88 = vmatpush1.msra.mxu0 0.0
    %89 = vmatprep.subr.mxu0 0.0
    %90 = vmatpush1.msra.mxu0 0.0
    %91 = vmatprep.subr.mxu0 0.0
    %92 = vmatpush1.msra.mxu0 0.0
    %93 = vmatprep.subr.mxu0 0.0
    %94 = vmatpush1.msra.mxu0 0.0
    %95 = vmatprep.subr.mxu0 0.0
    %96 = vmatpush1.msra.mxu0 0.0
    %97 = vmatprep.subr.mxu0 0.0
    %98 = vmatpush1.msra.mxu0 0.0
    %99 = vmatprep.subr.mxu0 0.0
    %100 = vmatpush1.msra.mxu0 0.0
    %101 = vmatprep.subr.mxu0 0.0
    %102 = vmatpush1.msra.mxu0 0.0
    %103 = vmatprep.mubr.f32.mxu0 0.0
    %104 = vmatmul.mubr.f32.gmra.mrb[0].mxu0 %v15
    %v105 = vpop.f32.mrb[0].mxu0
    %v106 = vadd.f32 %v37, %v105
    %v107 = vpop.f32.mrb[0].mxu0
    %108 = vdwg.mxu0
    %v109 = vmax.f32 %v106, 0.0
    %v110 = vadd.f32 %v109, %v15
    %111 = vst [vmem:[#allocation2] sm:$0xff] %v110
    // Predicated region
    $region14: #{residual_block.1} parent=1 // pred_check
      _
    $region15: #{residual_block.1} parent=1 // pred_check_branch
      %113 = sbr.rel (0) target = $region17
    $region16: #{residual_block.1} parent=1 // pred_region
      %s115 = ssub.s32 128, 128
      %116 = vsyncadd [#allocation3], %s115
      %s118 = sshll.u32 [#allocation2], 4
      %s119 = int_to_ptr.vmem [resolvable:$true] %s118
      %121 = dma.vmem_to_hbm [thread:$0]  %s119, 128, %s3, [#allocation3]
    $region17: #{residual_block.1} parent=1 // pred_fallthru
      _
    // Predicated region
    $region18: #{residual_block.1} parent=1 // pred_check
      _
    $region19: #{residual_block.1} parent=1 // pred_check_branch
      %123 = sbr.rel (0) target = $region21
    $region20: #{residual_block.1} parent=1 // pred_region
      %124 = dma.done [#allocation3], 128
    $region21: #{residual_block.1} parent=1 // pred_fallthru
      _
    %125 = vsyncpa [#allocation3], 1

</llo_original>
